<compile_context>
chip_gen: v6e
topology: v6e:2x2x1
jax: 0.10.0
libtpu: 0.0.40
codegen_flags: <defaults>
</compile_context>

<pallas_src>
import functools

import jax
import jax.numpy as jnp
from jax.experimental import pallas as pl
from jax.experimental.pallas import tpu as pltpu


def _round_up(v: int, m: int) -> int:
    return ((v + m - 1) // m) * m


def _pad2d(a, rows: int, cols: int):
    return jnp.pad(a, ((0, rows - a.shape[0]), (0, cols - a.shape[1])))


def _layernorm_relu(h, params_ref, nhid: int, eps: float):
    """bias-add + LayerNorm over the valid `nhid` columns + ReLU, all in f32.

    Padded columns of `h` are zero (W / XW / bias zero-padded), so full-width
    sums equal valid-width sums; padded columns are re-zeroed by the
    zero-padded gamma/beta affine.  params slab rows: 0=bias, 1=gamma, 2=beta.
    """
    bias = params_ref[0:1, :]
    gamma = params_ref[1:2, :]
    beta = params_ref[2:3, :]
    h = h + bias
    inv_n = 1.0 / float(nhid)
    mean = jnp.sum(h, axis=-1, keepdims=True) * inv_n
    ex2 = jnp.sum(h * h, axis=-1, keepdims=True) * inv_n
    # Single-pass variance can go slightly negative from cancellation; clamp.
    var = jnp.maximum(ex2 - mean * mean, 0.0)
    hn = (h - mean) * jax.lax.rsqrt(var + eps)
    hn = hn * gamma + beta
    return jnp.maximum(hn, 0.0)


def _net_kernel_single(m_ref, xw_ref, params_ref, o_ref, *, nhid, eps):
    """Full contraction in one step: out[i] = epilogue(M[i, :] @ XW)."""
    h = jnp.dot(m_ref[...], xw_ref[...], preferred_element_type=jnp.float32)
    o_ref[...] = _layernorm_relu(h, params_ref, nhid, eps).astype(o_ref.dtype)


def _net_kernel_tiled(m_ref, xw_ref, params_ref, o_ref, acc_ref, *, nhid, eps):
    """K-tiled: acc[i] += M[i, k] @ XW[k]; epilogue at the last k."""
    k = pl.program_id(1)

    @pl.when(k == 0)
    def _():
        acc_ref[...] = jnp.zeros_like(acc_ref)

    acc_ref[...] += jnp.dot(m_ref[...], xw_ref[...],
                            preferred_element_type=jnp.float32)

    @pl.when(k == pl.num_programs(1) - 1)
    def _():
        o_ref[...] = _layernorm_relu(acc_ref[...], params_ref, nhid,
                                     eps).astype(o_ref.dtype)


def precompose_operator(d_stack, filt, lev: int):
    """M = d[K-1]..d[Lev-1] @ diag(filter[:N]) @ d[K-1]..d[0].

    x-independent; compute once per graph and reuse across forward passes
    (hoisted out of the per-forward path per review).
    """
    num_d, n, _ = d_stack.shape
    d_stack = d_stack.astype(jnp.float32)
    m = d_stack[0]
    for i in range(1, num_d):
        m = d_stack[i] @ m                     # D_dec = d[K-1] @ ... @ d[0]
    m = filt[:n].astype(jnp.float32) * m       # diag(filter[:N]) @ D_dec
    for i in range(lev - 1, num_d):
        m = d_stack[i] @ m                     # D_rec @ ...
    return m


def net_forward(x, m, weight, bias, gamma, beta, *, eps: float = 1e-5,
                compute_dtype=jnp.bfloat16):
    n, _ = x.shape
    nhid = weight.shape[1]

    # x @ W depends only on the reduction index -> compute once here (f32),
    # not on every grid step inside the kernel.
    xw = x.astype(jnp.float32) @ weight.astype(jnp.float32)     # (n, nhid)

    # Lane-dense feature padding; 256-align when nhid is large (v6e/v7x MXU).
    h_pad = _round_up(nhid, 256) if nhid > 128 else _round_up(nhid, 128)
    bytes_c = jnp.dtype(compute_dtype).itemsize

    # Merged params slab: row 0 = bias, 1 = gamma, 2 = beta, rest zero.
    params = jnp.zeros((8, h_pad), jnp.float32)
    params = params.at[0, :nhid].set(bias.astype(jnp.float32))
    params = params.at[1, :nhid].set(gamma.astype(jnp.float32))
    params = params.at[2, :nhid].set(beta.astype(jnp.float32))

    # --- Single-pass candidate: full contraction per row tile. --------------
    n_pad_s = _round_up(n, 8)
    tm_s = min(256, n_pad_s)
    n_pad_s = _round_up(n_pad_s, tm_s)
    est_s = (2 * tm_s * n_pad_s * bytes_c        # M row panel (double-buffered)
             + 2 * n_pad_s * h_pad * bytes_c     # XW (double-buffered)
             + 2 * tm_s * h_pad * 4              # output tile (double-buffered)
             + 2 * 8 * h_pad * 4)                # params slab

    if est_s <= 32 * 1024 * 1024:
        n_pad, tm = n_pad_s, tm_s
        m_p = _pad2d(m.astype(jnp.float32), n_pad, n_pad).astype(compute_dtype)
        xw_p = _pad2d(xw, n_pad, h_pad).astype(compute_dtype)
        vmem_limit = int(min(max(2 * est_s, 16 << 20), 48 << 20))
        kern = functools.partial(_net_kernel_single, nhid=nhid, eps=eps)
        out_p = pl.pallas_call(
            kern,
            out_shape=jax.ShapeDtypeStruct((n_pad, h_pad), jnp.float32),
            grid_spec=pltpu.PrefetchScalarGridSpec(
                num_scalar_prefetch=0,
                grid=(n_pad // tm,),
                in_specs=[
                    pl.BlockSpec((tm, n_pad), lambda i: (i, 0)),    # M rows
                    pl.BlockSpec((n_pad, h_pad), lambda i: (0, 0)),  # XW
                    pl.BlockSpec((8, h_pad), lambda i: (0, 0)),      # params
                ],
                out_specs=pl.BlockSpec((tm, h_pad), lambda i: (i, 0)),
            ),
            compiler_params=pltpu.CompilerParams(
                dimension_semantics=("parallel",),
                vmem_limit_bytes=vmem_limit),
        )(m_p, xw_p, params)
    else:
        # --- K-tiled accumulator path for large graphs. ----------------------
        tm, tk = 256, 512
        n_pad = _round_up(n, max(tm, tk))
        est_t = (2 * tm * tk * bytes_c
                 + 2 * tk * h_pad * bytes_c
                 + 2 * tm * h_pad * 4
                 + 2 * 8 * h_pad * 4
                 + tm * h_pad * 4)               # f32 acc scratch
        m_p = _pad2d(m.astype(jnp.float32), n_pad, n_pad).astype(compute_dtype)
        xw_p = _pad2d(xw, n_pad, h_pad).astype(compute_dtype)
        vmem_limit = int(min(max(2 * est_t, 16 << 20), 48 << 20))
        kern = functools.partial(_net_kernel_tiled, nhid=nhid, eps=eps)
        out_p = pl.pallas_call(
            kern,
            out_shape=jax.ShapeDtypeStruct((n_pad, h_pad), jnp.float32),
            grid_spec=pltpu.PrefetchScalarGridSpec(
                num_scalar_prefetch=0,
                grid=(n_pad // tm, n_pad // tk),
                in_specs=[
                    pl.BlockSpec((tm, tk), lambda i, k: (i, k)),      # M tile
                    pl.BlockSpec((tk, h_pad), lambda i, k: (k, 0)),   # XW rows
                    pl.BlockSpec((8, h_pad), lambda i, k: (0, 0)),    # params
                ],
                out_specs=pl.BlockSpec((tm, h_pad), lambda i, k: (i, 0)),
                scratch_shapes=[pltpu.VMEM((tm, h_pad), jnp.float32)],
            ),
            compiler_params=pltpu.CompilerParams(
                dimension_semantics=("parallel", "arbitrary"),
                vmem_limit_bytes=vmem_limit),
        )(m_p, xw_p, params)

    return out_p[:n, :nhid]


if __name__ == "__main__":
    # Small shapes implied by the module.
    num_nodes = 64      # N
    num_features = 32   # in_features
    nhid = 32           # out_features / LayerNorm dim
    r, Lev = 2, 2
    num_d = r * Lev     # number of framelet operators in d_list

    key = jax.random.PRNGKey(0)
    k_x, k_w, k_f, k_d = jax.random.split(key, 4)

    # Input node features.
    x = jax.random.normal(k_x, (num_nodes, num_features), dtype=jnp.float32)

    # UFGConv parameters (matching __init__ shapes & init distributions).
    limit = (6.0 / (num_features + nhid)) ** 0.5          # xavier_uniform
    weight = jax.random.uniform(k_w, (num_features, nhid),
                                minval=-limit, maxval=limit, dtype=jnp.float32)
    filt = jax.random.uniform(k_f, (r * Lev * num_nodes, 1),
                              minval=0.9, maxval=1.1, dtype=jnp.float32)
    bias = jnp.zeros((nhid,), dtype=jnp.float32)
    gamma = jnp.ones((nhid,), dtype=jnp.float32)
    beta = jnp.zeros((nhid,), dtype=jnp.float32)

    # d_list: num_d square graph operators, stacked; scaled so repeated
    # application stays well-conditioned (deterministic synthetic operators).
    d_stack = (jax.random.normal(k_d, (num_d, num_nodes, num_nodes),
                                 dtype=jnp.float32) / jnp.sqrt(num_nodes)
               + 0.5 * jnp.eye(num_nodes, dtype=jnp.float32)[None, :, :])

    # Computed once per graph (hoisted out of the steady-state forward path).
    m = precompose_operator(d_stack, filt, Lev)

    out = net_forward(x, m, weight, bias, gamma, beta)
    out = jax.block_until_ready(out)

    # Pure-JAX f32 reference to validate the bf16-operand kernel path.
    def reference(x, d_stack, weight, filt, bias, gamma, beta, lev, eps=1e-5):
        h = x @ weight
        for i in range(d_stack.shape[0]):
            h = d_stack[i] @ h
        h = h * filt[: h.shape[0]]
        for i in range(lev - 1, d_stack.shape[0]):
            h = d_stack[i] @ h
        h = h + bias
        mean = jnp.mean(h, axis=-1, keepdims=True)
        var = jnp.mean((h - mean) ** 2, axis=-1, keepdims=True)
        hn = (h - mean) / jnp.sqrt(var + eps)
        hn = hn * gamma + beta
        return jnp.maximum(hn, 0.0)

    ref = reference(x, d_stack, weight, filt, bias, gamma, beta, Lev)

    assert out.shape == (num_nodes, nhid)
    assert out.dtype == jnp.float32
    assert bool(jnp.all(jnp.isfinite(out)))
    max_err = float(jnp.max(jnp.abs(out - ref)))
    assert max_err < 1e-1, f"max abs error vs f32 reference: {max_err}"
    print("KERNEL_OK")
</pallas_src>

<mosaic_0001>
module attributes {stable_mosaic.version = 11 : i64} {
  func.func @_net_kernel_single(%arg0: i32, %arg1: memref<64x64xbf16, #tpu.memory_space<vmem>>, %arg2: memref<64x128xbf16, #tpu.memory_space<vmem>>, %arg3: memref<8x128xf32, #tpu.memory_space<vmem>>, %arg4: memref<64x128xf32, #tpu.memory_space<vmem>>) attributes {dimension_semantics = [#tpu.dimension_semantics<parallel>], iteration_bounds = array<i64: 1>, scalar_prefetch = 0 : i64, scratch_operands = 0 : i64, tpu.core_type = #tpu.core_type<tc>, window_params = [{transform_indices = @transform_0, window_bounds = array<i64: 64, 64>}, {pipeline_mode = #tpu.pipeline_mode<synchronous>, transform_indices = @transform_1, window_bounds = array<i64: 64, 128>}, {pipeline_mode = #tpu.pipeline_mode<synchronous>, transform_indices = @transform_2, window_bounds = array<i64: 8, 128>}, {transform_indices = @transform_3, window_bounds = array<i64: 64, 128>}]} {
    %c0 = arith.constant 0 : index
    %c0_0 = arith.constant 0 : index
    %0 = vector.load %arg1[%c0, %c0_0] : memref<64x64xbf16, #tpu.memory_space<vmem>>, vector<64x64xbf16>
    %c0_1 = arith.constant 0 : index
    %c0_2 = arith.constant 0 : index
    %1 = vector.load %arg2[%c0_1, %c0_2] : memref<64x128xbf16, #tpu.memory_space<vmem>>, vector<64x128xbf16>
    %cst = arith.constant dense<0.000000e+00> : vector<64x128xf32>
    %2 = tpu.matmul %0, %1, %cst {dimension_numbers = #tpu.dot_dimension_numbers<[1], [0], [0], [1], [0, 0, 1, 1], [], []>} : vector<64x64xbf16>, vector<64x128xbf16>, vector<64x128xf32> -> vector<64x128xf32>
    %c0_3 = arith.constant 0 : index
    %c0_4 = arith.constant 0 : index
    %3 = vector.load %arg3[%c0_3, %c0_4] : memref<8x128xf32, #tpu.memory_space<vmem>>, vector<1x128xf32>
    %c1 = arith.constant 1 : index
    %c0_5 = arith.constant 0 : index
    %4 = vector.load %arg3[%c1, %c0_5] : memref<8x128xf32, #tpu.memory_space<vmem>>, vector<1x128xf32>
    %c2 = arith.constant 2 : index
    %c0_6 = arith.constant 0 : index
    %5 = vector.load %arg3[%c2, %c0_6] : memref<8x128xf32, #tpu.memory_space<vmem>>, vector<1x128xf32>
    %6 = vector.broadcast %3 : vector<1x128xf32> to vector<64x128xf32>
    %7 = arith.addf %2, %6 : vector<64x128xf32>
    %cst_7 = arith.constant dense<0.000000e+00> : vector<64xf32>
    %8 = vector.multi_reduction <add>, %7, %cst_7 [1] : vector<64x128xf32> to vector<64xf32>
    %9 = vector.shape_cast %8 : vector<64xf32> to vector<64x1xf32>
    %cst_8 = arith.constant 3.125000e-02 : f32
    %10 = vector.broadcast %cst_8 : f32 to vector<64x1xf32>
    %11 = arith.mulf %9, %10 : vector<64x1xf32>
    %12 = arith.mulf %7, %7 : vector<64x128xf32>
    %cst_9 = arith.constant dense<0.000000e+00> : vector<64xf32>
    %13 = vector.multi_reduction <add>, %12, %cst_9 [1] : vector<64x128xf32> to vector<64xf32>
    %14 = vector.shape_cast %13 : vector<64xf32> to vector<64x1xf32>
    %cst_10 = arith.constant 3.125000e-02 : f32
    %15 = vector.broadcast %cst_10 : f32 to vector<64x1xf32>
    %16 = arith.mulf %14, %15 : vector<64x1xf32>
    %17 = arith.mulf %11, %11 : vector<64x1xf32>
    %18 = arith.subf %16, %17 : vector<64x1xf32>
    %cst_11 = arith.constant 0.000000e+00 : f32
    %19 = vector.broadcast %cst_11 : f32 to vector<64x1xf32>
    %20 = arith.maximumf %18, %19 : vector<64x1xf32>
    %21 = vector.broadcast %11 : vector<64x1xf32> to vector<64x128xf32>
    %22 = arith.subf %7, %21 : vector<64x128xf32>
    %cst_12 = arith.constant 9.99999974E-6 : f32
    %23 = vector.broadcast %cst_12 : f32 to vector<64x1xf32>
    %24 = arith.addf %20, %23 : vector<64x1xf32>
    %25 = math.rsqrt %24 : vector<64x1xf32>
    %26 = vector.broadcast %25 : vector<64x1xf32> to vector<64x128xf32>
    %27 = arith.mulf %22, %26 : vector<64x128xf32>
    %28 = vector.broadcast %4 : vector<1x128xf32> to vector<64x128xf32>
    %29 = arith.mulf %27, %28 : vector<64x128xf32>
    %30 = vector.broadcast %5 : vector<1x128xf32> to vector<64x128xf32>
    %31 = arith.addf %29, %30 : vector<64x128xf32>
    %cst_13 = arith.constant 0.000000e+00 : f32
    %32 = vector.broadcast %cst_13 : f32 to vector<64x128xf32>
    %33 = arith.maximumf %31, %32 : vector<64x128xf32>
    %c0_14 = arith.constant 0 : index
    %c0_15 = arith.constant 0 : index
    %34 = vector.load %arg4[%c0_14, %c0_15] : memref<64x128xf32, #tpu.memory_space<vmem>>, vector<64x128xf32>
    tpu.vector_store %arg4[%c0_14, %c0_15], %33 {strides = array<i32>} : memref<64x128xf32, #tpu.memory_space<vmem>>, vector<64x128xf32>,
    return
  }
  func.func @transform_0(%arg0: i32) -> (i32, i32) {
    %c0_i32 = arith.constant 0 : i32
    %c0_i32_0 = arith.constant 0 : i32
    return %arg0, %c0_i32 : i32, i32
  }
  func.func @transform_1(%arg0: i32) -> (i32, i32) {
    %c0_i32 = arith.constant 0 : i32
    %c0_i32_0 = arith.constant 0 : i32
    %c0_i32_1 = arith.constant 0 : i32
    return %c0_i32, %c0_i32_0 : i32, i32
  }
  func.func @transform_2(%arg0: i32) -> (i32, i32) {
    %c0_i32 = arith.constant 0 : i32
    %c0_i32_0 = arith.constant 0 : i32
    %c0_i32_1 = arith.constant 0 : i32
    return %c0_i32, %c0_i32_0 : i32, i32
  }
  func.func @transform_3(%arg0: i32) -> (i32, i32) {
    %c0_i32 = arith.constant 0 : i32
    %c0_i32_0 = arith.constant 0 : i32
    return %arg0, %c0_i32 : i32, i32
  }
}

</mosaic_0001>

<llo_original>
// kernel: tpu_custom_call.1
$region0: #{tpu_custom_call.1}
  #allocation0 [shape = 'u32[]', space=smem, size = 0x4, offset = 0x4, fixed_abs, tag = 'smem constant byte address 0x4 - core index']
  #allocation1 [shape = 'u32[144,128]{1,0:T(1,128)}', space=vmem, size = 0x12000, scoped, tag = 'internal scratch']
  %s0 = inlined_call_operand.hbm [shape: bf16[64,64], index: 0, kind: input, shape index: {}]
  %s1 = inlined_call_operand.hbm [shape: bf16[64,128], index: 1, kind: input, shape index: {}]
  %s2 = inlined_call_operand.hbm [shape: f32[8,128], index: 2, kind: input, shape index: {}]
  %s3 = inlined_call_operand.hbm [shape: f32[64,128], index: 3, kind: output, shape index: {}]
  %s4 = sld [smem:[#allocation0]]
  $region34: #{tpu_custom_call.1} parent=0
    _
  %s6 = ssub.s32 1, %s4
  %s7 = scalar_select 0, %s6, %s4
  $region1: #{tpu_custom_call.1} parent=0
    #allocation2 [shape = 'u8[16384]{0}', space=vmem, size = 0x4000, scoped, tag = 'input window, operand 0, single buffered']
    #allocation3 [shape = 's32[1]{0}', space=sflag, size = 0x4, scoped, tag = 'scoped memory for tpu_custom_call.1']
    #allocation4 [shape = 's32[1]{0}', space=sflag, size = 0x4, scoped, tag = 'scoped memory for tpu_custom_call.1']
    #allocation5 [shape = 'u8[16384]{0}', space=vmem, size = 0x4000, scoped, tag = 'input window, operand 1, single buffered']
    #allocation6 [shape = 's32[1]{0}', space=sflag, size = 0x4, scoped, tag = 'scoped memory for tpu_custom_call.1']
    #allocation7 [shape = 'u8[4096]{0}', space=vmem, size = 0x1000, scoped, tag = 'input window, operand 2, single buffered']
    #allocation8 [shape = 'u8[32768]{0}', space=vmem, size = 0x8000, scoped, tag = 'output window, operand 0, single buffered']
    %8 = vsyncpa [#allocation3], 0
    %9 = vsyncpa [#allocation6], 0
    %10 = vsyncpa [#allocation4], 0
    // Predicated region
    $region2: #{tpu_custom_call.1} parent=1 // pred_check
      _
    $region3: #{tpu_custom_call.1} parent=1 // pred_check_branch
      %12 = sbr.rel (0) target = $region5
    $region4: #{tpu_custom_call.1} parent=1 // pred_region
      %s14 = ssub.s32 512, 512
      %15 = vsyncadd [#allocation3], %s14
      %s16 = sshll.u32 [#allocation2], 4
      %s17 = int_to_ptr.vmem [resolvable:$true] %s16
      %22 = dma.hbm_to_vmem [thread:$0]  %s0, 512, %s17, [#allocation3], 64, 64, 4
    $region5: #{tpu_custom_call.1} parent=1 // pred_fallthru
      _
    // Predicated region
    $region6: #{tpu_custom_call.1} parent=1 // pred_check
      _
    $region7: #{tpu_custom_call.1} parent=1 // pred_check_branch
      %24 = sbr.rel (0) target = $region9
    $region8: #{tpu_custom_call.1} parent=1 // pred_region
      %s26 = ssub.s32 512, 512
      %27 = vsyncadd [#allocation6], %s26
      %s28 = sshll.u32 [#allocation5], 4
      %s29 = int_to_ptr.vmem [resolvable:$true] %s28
      %34 = dma.hbm_to_vmem [thread:$0]  %s1, 512, %s29, [#allocation6], 64, 64, 4
    $region9: #{tpu_custom_call.1} parent=1 // pred_fallthru
      _
    // Predicated region
    $region10: #{tpu_custom_call.1} parent=1 // pred_check
      _
    $region11: #{tpu_custom_call.1} parent=1 // pred_check_branch
      %36 = sbr.rel (0) target = $region13
    $region12: #{tpu_custom_call.1} parent=1 // pred_region
      %s38 = ssub.s32 128, 128
      %39 = vsyncadd [#allocation6], %s38
      %s41 = sshll.u32 [#allocation7], 4
      %s42 = int_to_ptr.vmem [resolvable:$true] %s41
      %44 = dma.hbm_to_vmem [thread:$0]  %s2, 128, %s42, [#allocation6]
    $region13: #{tpu_custom_call.1} parent=1 // pred_fallthru
      _
    // Predicated region
    $region14: #{tpu_custom_call.1} parent=1 // pred_check
      _
    $region15: #{tpu_custom_call.1} parent=1 // pred_check_branch
      %46 = sbr.rel (0) target = $region17
    $region16: #{tpu_custom_call.1} parent=1 // pred_region
      %47 = dma.done [#allocation3], 512
    $region17: #{tpu_custom_call.1} parent=1 // pred_fallthru
      _
    // Predicated region
    $region18: #{tpu_custom_call.1} parent=1 // pred_check
      _
    $region19: #{tpu_custom_call.1} parent=1 // pred_check_branch
      %49 = sbr.rel (0) target = $region21
    $region20: #{tpu_custom_call.1} parent=1 // pred_region
      %50 = dma.done [#allocation6], 512
    $region21: #{tpu_custom_call.1} parent=1 // pred_fallthru
      _
    // Predicated region
    $region22: #{tpu_custom_call.1} parent=1 // pred_check
      _
    $region23: #{tpu_custom_call.1} parent=1 // pred_check_branch
      %52 = sbr.rel (0) target = $region25
    $region24: #{tpu_custom_call.1} parent=1 // pred_region
      %53 = dma.done [#allocation6], 128
    $region25: #{tpu_custom_call.1} parent=1 // pred_fallthru
      _
    %v55 = vld [vmem:[#allocation2] sm:$0xf]
    %v56 = vld [vmem:[#allocation2 + $0x4] sm:$0xf]
    %v57 = vld [vmem:[#allocation2 + $0x8] sm:$0xf]
    %v58 = vld [vmem:[#allocation2 + $0xc] sm:$0xf]
    %v59 = vld [vmem:[#allocation2 + $0x10] sm:$0xf]
    %v60 = vld [vmem:[#allocation2 + $0x14] sm:$0xf]
    %v61 = vld [vmem:[#allocation2 + $0x18] sm:$0xf]
    %v62 = vld [vmem:[#allocation2 + $0x1c] sm:$0xf]
    %v63 = vld [vmem:[#allocation5] sm:$0xf]
    %v64 = vld [vmem:[#allocation5 + $0x4] sm:$0xf]
    %v65 = vld [vmem:[#allocation5 + $0x8] sm:$0xf]
    %v66 = vld [vmem:[#allocation5 + $0xc] sm:$0xf]
    %v67 = vld [vmem:[#allocation5 + $0x10] sm:$0xf]
    %v68 = vld [vmem:[#allocation5 + $0x14] sm:$0xf]
    %v69 = vld [vmem:[#allocation5 + $0x18] sm:$0xf]
    %v70 = vld [vmem:[#allocation5 + $0x1c] sm:$0xf]
    %v71 = vld [vmem:[#allocation7] sm:$0x1]
    %v72 = vld [vmem:[#allocation7 + $0x1] sm:$0x1]
    %v73 = vld [vmem:[#allocation7 + $0x2] sm:$0x1]
    %v74 = vlaneseq
    %v75 = vshrl.u32 %v74, 7
    %v76 = vsub.s32 0, %v75
    %v77 = vrot.slane %v71, %v76
    %v86 = vunpack.c.l.b16 %v55
    %v87 = vunpack.c.l.b16 %v56
    %v88 = vunpack.c.l.b16 %v57
    %v89 = vunpack.c.l.b16 %v58
    %v90 = vunpack.c.l.b16 %v59
    %v91 = vunpack.c.l.b16 %v60
    %v92 = vunpack.c.l.b16 %v61
    %v93 = vunpack.c.l.b16 %v62
    %v94 = vpack.c.b16 %v87, %v86
    %v95 = vpack.c.b16 %v89, %v88
    %v96 = vpack.c.b16 %v91, %v90
    %v97 = vpack.c.b16 %v93, %v92
    %v106 = vunpack.c.l.b16 %v63
    %v107 = vunpack.c.l.b16 %v64
    %v108 = vunpack.c.l.b16 %v65
    %v109 = vunpack.c.l.b16 %v66
    %v110 = vunpack.c.l.b16 %v67
    %v111 = vunpack.c.l.b16 %v68
    %v112 = vunpack.c.l.b16 %v69
    %v113 = vunpack.c.l.b16 %v70
    %v114 = vpack.c.b16 %v107, %v106
    %v115 = vpack.c.b16 %v109, %v108
    %v116 = vpack.c.b16 %v111, %v110
    %v117 = vpack.c.b16 %v113, %v112
    %vm122 = vcmask 523264
    %v124 = vsel %vm122, %v94, 0
    %v127 = vsel %vm122, %v95, 0
    %v130 = vsel %vm122, %v96, 0
    %v133 = vsel %vm122, %v97, 0
    %135 = vmatprep.subr.bf16.mxu0 0
    %136 = vmatpush1.bf16.msra.mxu0 0
    %137 = vmatprep.subr.bf16.mxu0 0
    %138 = vmatpush1.bf16.msra.mxu0 0
    %139 = vmatprep.subr.bf16.mxu0 0
    %140 = vmatpush1.bf16.msra.mxu0 0
    %141 = vmatprep.subr.bf16.mxu0 0
    %142 = vmatpush1.bf16.msra.mxu0 0
    %143 = vmatprep.subr.bf16.mxu0 0
    %144 = vmatpush1.bf16.msra.mxu0 %v117
    %145 = vmatprep.subr.bf16.mxu0 0
    %146 = vmatpush1.bf16.msra.mxu0 %v116
    %147 = vmatprep.subr.bf16.mxu0 0
    %148 = vmatpush1.bf16.msra.mxu0 %v115
    %149 = vmatprep.subr.bf16.mxu0 0
    %150 = vmatpush1.bf16.msra.mxu0 %v114
    %151 = vmatprep.subr.bf16.mxu0 0
    %152 = vmatpush2.bf16.msra.mxu0 0
    %153 = vmatprep.subr.bf16.mxu0 0
    %154 = vmatpush2.bf16.msra.mxu0 0
    %155 = vmatprep.subr.bf16.mxu0 0
    %156 = vmatpush2.bf16.msra.mxu0 0
    %157 = vmatprep.subr.bf16.mxu0 0
    %158 = vmatpush2.bf16.msra.mxu0 0
    %159 = vmatprep.subr.bf16.mxu0 0
    %160 = vmatpush2.bf16.msra.mxu0 0
    %161 = vmatprep.subr.bf16.mxu0 0
    %162 = vmatpush2.bf16.msra.mxu0 0
    %163 = vmatprep.subr.bf16.mxu0 0
    %164 = vmatpush2.bf16.msra.mxu0 0
    %165 = vmatprep.subr.bf16.mxu0 0
    %166 = vmatpush2.bf16.msra.mxu0 0
    %167 = vmatprep.mubr.bf16.mxu0 0
    %168 = vmatmul.mubr.bf16.gmra.mxu0 %v124
    %v169 = vpop.f32.mrf.mxu0
    %v170 = vadd.f32 %v77, %v169
    %v171 = vpop.f32.mrf.mxu0
    %v172 = vpop.f32.mrf.mxu0
    %v173 = vadd.f32 %v77, %v172
    %v174 = vpop.f32.mrf.mxu0
    %175 = vmatprep.mubr.bf16.mxu0 0
    %176 = vmatmul.mubr.bf16.gmra.mxu0 %v127
    %v177 = vpop.f32.mrf.mxu0
    %v178 = vadd.f32 %v77, %v177
    %v179 = vpop.f32.mrf.mxu0
    %v180 = vpop.f32.mrf.mxu0
    %v181 = vadd.f32 %v77, %v180
    %v182 = vpop.f32.mrf.mxu0
    %183 = vmatprep.mubr.bf16.mxu0 0
    %184 = vmatmul.mubr.bf16.gmra.mxu0 %v130
    %v185 = vpop.f32.mrf.mxu0
    %v186 = vadd.f32 %v77, %v185
    %v187 = vpop.f32.mrf.mxu0
    %v188 = vpop.f32.mrf.mxu0
    %v189 = vadd.f32 %v77, %v188
    %v190 = vpop.f32.mrf.mxu0
    %191 = vmatprep.mubr.bf16.mxu0 0
    %192 = vmatmul.mubr.bf16.gmra.mxu0 %v133
    %v193 = vpop.f32.mrf.mxu0
    %v194 = vadd.f32 %v77, %v193
    %v195 = vpop.f32.mrf.mxu0
    %v196 = vpop.f32.mrf.mxu0
    %v197 = vadd.f32 %v77, %v196
    %v198 = vpop.f32.mrf.mxu0
    %199 = vdwg.mxu0
    %200 = vadd.xlane.f32.xlu0 %v170
    %v201 = vpop.xlane.xlu0 %200
    %202 = vadd.xlane.f32.xlu0 %v173
    %v203 = vpop.xlane.xlu0 %202
    %204 = vadd.xlane.f32.xlu0 %v178
    %v205 = vpop.xlane.xlu0 %204
    %206 = vadd.xlane.f32.xlu0 %v181
    %v207 = vpop.xlane.xlu0 %206
    %208 = vadd.xlane.f32.xlu0 %v186
    %v209 = vpop.xlane.xlu0 %208
    %210 = vadd.xlane.f32.xlu0 %v189
    %v211 = vpop.xlane.xlu0 %210
    %212 = vadd.xlane.f32.xlu0 %v194
    %v213 = vpop.xlane.xlu0 %212
    %214 = vadd.xlane.f32.xlu0 %v197
    %v215 = vpop.xlane.xlu0 %214
    %v216 = vmul.f32 %v201, 0.03125
    %v217 = vmul.f32 %v203, 0.03125
    %v218 = vmul.f32 %v205, 0.03125
    %v219 = vmul.f32 %v207, 0.03125
    %v220 = vmul.f32 %v209, 0.03125
    %v221 = vmul.f32 %v211, 0.03125
    %v222 = vmul.f32 %v213, 0.03125
    %v223 = vmul.f32 %v215, 0.03125
    %v224 = vmul.f32 %v170, %v170
    %v225 = vmul.f32 %v173, %v173
    %v226 = vmul.f32 %v178, %v178
    %v227 = vmul.f32 %v181, %v181
    %v228 = vmul.f32 %v186, %v186
    %v229 = vmul.f32 %v189, %v189
    %v230 = vmul.f32 %v194, %v194
    %v231 = vmul.f32 %v197, %v197
    %232 = vadd.xlane.f32.xlu0 %v224
    %v233 = vpop.xlane.xlu0 %232
    %234 = vadd.xlane.f32.xlu0 %v225
    %v235 = vpop.xlane.xlu0 %234
    %236 = vadd.xlane.f32.xlu0 %v226
    %v237 = vpop.xlane.xlu0 %236
    %238 = vadd.xlane.f32.xlu0 %v227
    %v239 = vpop.xlane.xlu0 %238
    %240 = vadd.xlane.f32.xlu0 %v228
    %v241 = vpop.xlane.xlu0 %240
    %242 = vadd.xlane.f32.xlu0 %v229
    %v243 = vpop.xlane.xlu0 %242
    %244 = vadd.xlane.f32.xlu0 %v230
    %v245 = vpop.xlane.xlu0 %244
    %246 = vadd.xlane.f32.xlu0 %v231
    %v247 = vpop.xlane.xlu0 %246
    %v248 = vmul.f32 %v233, 0.03125
    %v249 = vmul.f32 %v235, 0.03125
    %v250 = vmul.f32 %v237, 0.03125
    %v251 = vmul.f32 %v239, 0.03125
    %v252 = vmul.f32 %v241, 0.03125
    %v253 = vmul.f32 %v243, 0.03125
    %v254 = vmul.f32 %v245, 0.03125
    %v255 = vmul.f32 %v247, 0.03125
    %v256 = vmul.f32 %v216, %v216
    %v257 = vmul.f32 %v217, %v217
    %v258 = vmul.f32 %v218, %v218
    %v259 = vmul.f32 %v219, %v219
    %v260 = vmul.f32 %v220, %v220
    %v261 = vmul.f32 %v221, %v221
    %v262 = vmul.f32 %v222, %v222
    %v263 = vmul.f32 %v223, %v223
    %v264 = vsub.f32 %v248, %v256
    %v265 = vsub.f32 %v249, %v257
    %v266 = vsub.f32 %v250, %v258
    %v267 = vsub.f32 %v251, %v259
    %v268 = vsub.f32 %v252, %v260
    %v269 = vsub.f32 %v253, %v261
    %v270 = vsub.f32 %v254, %v262
    %v271 = vsub.f32 %v255, %v263
    %v272 = vmax.f32 %v264, 0.0
    %v273 = vmax.f32 %v265, 0.0
    %v274 = vmax.f32 %v266, 0.0
    %v275 = vmax.f32 %v267, 0.0
    %v276 = vmax.f32 %v268, 0.0
    %v277 = vmax.f32 %v269, 0.0
    %v278 = vmax.f32 %v270, 0.0
    %v279 = vmax.f32 %v271, 0.0
    %v280 = vsub.f32 %v170, %v216
    %v281 = vsub.f32 %v173, %v217
    %v282 = vsub.f32 %v178, %v218
    %v283 = vsub.f32 %v181, %v219
    %v284 = vsub.f32 %v186, %v220
    %v285 = vsub.f32 %v189, %v221
    %v286 = vsub.f32 %v194, %v222
    %v287 = vsub.f32 %v197, %v223
    %v288 = vadd.f32 %v272, 1e-05
    %v289 = vadd.f32 %v273, 1e-05
    %v290 = vadd.f32 %v274, 1e-05
    %v291 = vadd.f32 %v275, 1e-05
    %v292 = vadd.f32 %v276, 1e-05
    %v293 = vadd.f32 %v277, 1e-05
    %v294 = vadd.f32 %v278, 1e-05
    %v295 = vadd.f32 %v279, 1e-05
    %v296 = vrsqrt.pop %v288
    %v297 = vrsqrt.pop %v289
    %v298 = vrsqrt.pop %v290
    %v299 = vrsqrt.pop %v291
    %v300 = vrsqrt.pop %v292
    %v301 = vrsqrt.pop %v293
    %v302 = vrsqrt.pop %v294
    %v303 = vrsqrt.pop %v295
    %v304 = vmul.f32 %v280, %v296
    %v305 = vmul.f32 %v281, %v297
    %v306 = vmul.f32 %v282, %v298
    %v307 = vmul.f32 %v283, %v299
    %v308 = vmul.f32 %v284, %v300
    %v309 = vmul.f32 %v285, %v301
    %v310 = vmul.f32 %v286, %v302
    %v311 = vmul.f32 %v287, %v303
    %v312 = vlaneseq
    %v313 = vshrl.u32 %v312, 7
    %v314 = vsub.s32 0, %v313
    %v315 = vrot.slane %v72, %v314
    %v316 = vmul.f32 %v304, %v315
    %v317 = vmul.f32 %v305, %v315
    %v318 = vmul.f32 %v306, %v315
    %v319 = vmul.f32 %v307, %v315
    %v320 = vmul.f32 %v308, %v315
    %v321 = vmul.f32 %v309, %v315
    %v322 = vmul.f32 %v310, %v315
    %v323 = vmul.f32 %v311, %v315
    %v324 = vlaneseq
    %v325 = vshrl.u32 %v324, 7
    %v326 = vsub.s32 0, %v325
    %v327 = vrot.slane %v73, %v326
    %v328 = vadd.f32 %v316, %v327
    %v329 = vadd.f32 %v317, %v327
    %v330 = vadd.f32 %v318, %v327
    %v331 = vadd.f32 %v319, %v327
    %v332 = vadd.f32 %v320, %v327
    %v333 = vadd.f32 %v321, %v327
    %v334 = vadd.f32 %v322, %v327
    %v335 = vadd.f32 %v323, %v327
    %v336 = vmax.f32 %v328, 0.0
    %v337 = vmax.f32 %v329, 0.0
    %v338 = vmax.f32 %v330, 0.0
    %v339 = vmax.f32 %v331, 0.0
    %v340 = vmax.f32 %v332, 0.0
    %v341 = vmax.f32 %v333, 0.0
    %v342 = vmax.f32 %v334, 0.0
    %v343 = vmax.f32 %v335, 0.0
    %344 = vst [vmem:[#allocation8] sm:$0xff] %v336
    %345 = vst [vmem:[#allocation8 + $0x8] sm:$0xff] %v337
    %346 = vst [vmem:[#allocation8 + $0x10] sm:$0xff] %v338
    %347 = vst [vmem:[#allocation8 + $0x18] sm:$0xff] %v339
    %348 = vst [vmem:[#allocation8 + $0x20] sm:$0xff] %v340
    %349 = vst [vmem:[#allocation8 + $0x28] sm:$0xff] %v341
    %350 = vst [vmem:[#allocation8 + $0x30] sm:$0xff] %v342
    %351 = vst [vmem:[#allocation8 + $0x38] sm:$0xff] %v343
    // Predicated region
    $region26: #{tpu_custom_call.1} parent=1 // pred_check
      _
    $region27: #{tpu_custom_call.1} parent=1 // pred_check_branch
      %353 = sbr.rel (0) target = $region29
    $region28: #{tpu_custom_call.1} parent=1 // pred_region
      %s355 = ssub.s32 1024, 1024
      %356 = vsyncadd [#allocation4], %s355
      %s357 = sshll.u32 [#allocation8], 4
      %s358 = int_to_ptr.vmem [resolvable:$true] %s357
      %363 = dma.vmem_to_hbm [thread:$0]  %s358, 1024, %s3, [#allocation4], 128, 128, 8
    $region29: #{tpu_custom_call.1} parent=1 // pred_fallthru
      _
    // Predicated region
    $region30: #{tpu_custom_call.1} parent=1 // pred_check
      _
    $region31: #{tpu_custom_call.1} parent=1 // pred_check_branch
      %365 = sbr.rel (0) target = $region33
    $region32: #{tpu_custom_call.1} parent=1 // pred_region
      %366 = dma.done [#allocation4], 1024
    $region33: #{tpu_custom_call.1} parent=1 // pred_fallthru
      _
    %367 = vsyncpa [#allocation3], 1
    %368 = vsyncpa [#allocation6], 1
    %369 = vsyncpa [#allocation4], 1

</llo_original>
